<compile_context>
chip_gen: v6e
topology: v6e:2x2x1
jax: 0.10.0
libtpu: 0.0.40
codegen_flags: <defaults>
</compile_context>

<pallas_src>
import functools

import jax
import jax.numpy as jnp
from jax.experimental import pallas as pl
from jax.experimental.pallas import tpu as pltpu

LOG_STD_MIN = -20.0
LOG_STD_MAX = 2.0


def _round_up(x, m):
    return ((x + m - 1) // m) * m


def _pad_to(a, shape):
    return jnp.pad(a, [(0, t - s) for s, t in zip(a.shape, shape)])


def _policy_kernel(a_half, x_ref, w1_ref, b1_ref, w2_ref, b2_ref,
                   wh_ref, bh_ref, out_ref):
    x = x_ref[...]

    # linear1 + relu (f32 accumulation on the MXU)
    h1 = jnp.dot(x, w1_ref[...], preferred_element_type=jnp.float32) + b1_ref[...]
    h1 = jnp.maximum(h1, 0.0)

    # linear2 + relu
    h2 = jnp.dot(h1.astype(w2_ref.dtype), w2_ref[...],
                 preferred_element_type=jnp.float32) + b2_ref[...]
    h2 = jnp.maximum(h2, 0.0)

    # fused mean / log_std head: one matmul, one lane-dense store.
    heads = jnp.dot(h2.astype(wh_ref.dtype), wh_ref[...],
                    preferred_element_type=jnp.float32) + bh_ref[...]

    # clamp only the log_std half (columns >= a_half).
    col = jax.lax.broadcasted_iota(jnp.int32, heads.shape, 1)
    clipped = jnp.clip(heads, LOG_STD_MIN, LOG_STD_MAX)
    out_ref[...] = jnp.where(col >= a_half, clipped, heads).astype(out_ref.dtype)


def policy_forward(state, params, *, batch_tile=512, compute_dtype=None):
    """PolicyNetwork.forward as a single Pallas kernel.

    Returns (mean, log_std), each [B, num_actions] float32.
    `compute_dtype=jnp.bfloat16` enables the bf16 MXU operand path on v6e/v7x.
    """
    w1, b1, w2, b2, wm, bm, ws, bs = params
    B, num_inputs = state.shape
    H = w1.shape[1]
    A = wm.shape[1]

    # --- lane-align hidden and the fused head so matmuls / stores are dense ---
    h_pad = _round_up(H, 128)
    a_half = _round_up(A, 128)          # per-head lane width (>= 128)
    p = 2 * a_half                      # fused head width (multiple of 128)

    f32 = jnp.float32
    w1p = _pad_to(w1.astype(f32), (num_inputs, h_pad))
    b1p = _pad_to(b1.astype(f32), (1, h_pad))
    w2p = _pad_to(w2.astype(f32), (h_pad, h_pad))
    b2p = _pad_to(b2.astype(f32), (1, h_pad))
    whp = jnp.zeros((h_pad, p), f32)
    whp = whp.at[:H, :A].set(wm.astype(f32)).at[:H, a_half:a_half + A].set(ws.astype(f32))
    bhp = jnp.zeros((1, p), f32)
    bhp = bhp.at[:, :A].set(bm.astype(f32)).at[:, a_half:a_half + A].set(bs.astype(f32))

    # --- batch tiling: weights stay VMEM-resident, state/output stream ---
    tb = batch_tile if B >= batch_tile else _round_up(B, 8)
    b_pad = _round_up(B, tb)
    state_p = _pad_to(state.astype(f32), (b_pad, num_inputs))

    if compute_dtype is not None:
        state_p = state_p.astype(compute_dtype)
        w1p = w1p.astype(compute_dtype)
        w2p = w2p.astype(compute_dtype)
        whp = whp.astype(compute_dtype)

    grid = (b_pad // tb,)
    op_bytes = jnp.dtype(state_p.dtype).itemsize
    cost = pl.CostEstimate(
        flops=2 * b_pad * (num_inputs * h_pad + h_pad * h_pad + h_pad * p),
        transcendentals=0,
        bytes_accessed=(state_p.size * op_bytes
                        + (w1p.size + w2p.size + whp.size) * op_bytes
                        + (b1p.size + b2p.size + bhp.size) * 4
                        + b_pad * p * 4),
    )

    def resident(a):
        return pl.BlockSpec(a.shape, lambda i: (0,) * a.ndim)

    fused = pl.pallas_call(
        functools.partial(_policy_kernel, a_half),
        out_shape=jax.ShapeDtypeStruct((b_pad, p), jnp.float32),
        grid=grid,
        in_specs=[
            pl.BlockSpec((tb, num_inputs), lambda i: (i, 0)),   # streamed state
            resident(w1p), resident(b1p),
            resident(w2p), resident(b2p),
            resident(whp), resident(bhp),
        ],
        out_specs=pl.BlockSpec((tb, p), lambda i: (i, 0)),      # streamed output
        compiler_params=pltpu.CompilerParams(
            dimension_semantics=("parallel",)),                  # v7x: 2 TCs
        cost_estimate=cost,
    )(state_p, w1p, b1p, w2p, b2p, whp, bhp)

    mean = fused[:B, :A]
    log_std = fused[:B, a_half:a_half + A]
    return mean, log_std


def init_params(key, num_inputs, num_actions, hidden_size, init_w=0.003):
    """Deterministic init mirroring the PyTorch __init__ (uniform fan-in for
    linear1/linear2, uniform(-init_w, init_w) for the two heads).
    Weights are stored as [in, out] (transposed vs. nn.Linear)."""
    ks = jax.random.split(key, 8)

    def lin(kw, kb, fan_in, fan_out):
        bound = 1.0 / jnp.sqrt(fan_in)
        w = jax.random.uniform(kw, (fan_in, fan_out), jnp.float32, -bound, bound)
        b = jax.random.uniform(kb, (1, fan_out), jnp.float32, -bound, bound)
        return w, b

    def head(kw, kb, fan_in, fan_out):
        w = jax.random.uniform(kw, (fan_in, fan_out), jnp.float32, -init_w, init_w)
        b = jax.random.uniform(kb, (1, fan_out), jnp.float32, -init_w, init_w)
        return w, b

    w1, b1 = lin(ks[0], ks[1], num_inputs, hidden_size)
    w2, b2 = lin(ks[2], ks[3], hidden_size, hidden_size)
    wm, bm = head(ks[4], ks[5], hidden_size, num_actions)
    ws, bs = head(ks[6], ks[7], hidden_size, num_actions)
    return (w1, b1, w2, b2, wm, bm, ws, bs)


def reference_forward(state, params):
    w1, b1, w2, b2, wm, bm, ws, bs = params
    h1 = jnp.maximum(state @ w1 + b1, 0.0)
    h2 = jnp.maximum(h1 @ w2 + b2, 0.0)
    mean = h2 @ wm + bm
    log_std = jnp.clip(h2 @ ws + bs, LOG_STD_MIN, LOG_STD_MAX)
    return mean, log_std


if __name__ == "__main__":
    # Small shapes consistent with the module: state [B, num_inputs].
    B, NUM_INPUTS, NUM_ACTIONS, HIDDEN = 8, 16, 8, 32

    key = jax.random.PRNGKey(0)
    k_params, k_state, k_big = jax.random.split(key, 3)

    params = init_params(k_params, NUM_INPUTS, NUM_ACTIONS, HIDDEN)

    # --- tiny batch (single grid step) ---
    state = jax.random.normal(k_state, (B, NUM_INPUTS), jnp.float32)
    mean, log_std = policy_forward(state, params)
    jax.block_until_ready((mean, log_std))

    mean_ref, log_std_ref = reference_forward(state, params)
    assert mean.shape == (B, NUM_ACTIONS) and log_std.shape == (B, NUM_ACTIONS)
    assert jnp.allclose(mean, mean_ref, atol=1e-5, rtol=1e-5)
    assert jnp.allclose(log_std, log_std_ref, atol=1e-5, rtol=1e-5)

    # --- larger, non-multiple batch exercising the batch grid + padding path ---
    B2 = 260
    state2 = jax.random.normal(k_big, (B2, NUM_INPUTS), jnp.float32)
    mean2, log_std2 = policy_forward(state2, params, batch_tile=128)
    jax.block_until_ready((mean2, log_std2))
    mean2_ref, log_std2_ref = reference_forward(state2, params)
    assert mean2.shape == (B2, NUM_ACTIONS) and log_std2.shape == (B2, NUM_ACTIONS)
    assert jnp.allclose(mean2, mean2_ref, atol=1e-5, rtol=1e-5)
    assert jnp.allclose(log_std2, log_std2_ref, atol=1e-5, rtol=1e-5)

    print("KERNEL_OK")
</pallas_src>

<mosaic_0001>
module attributes {stable_mosaic.version = 11 : i64} {
  func.func @_policy_kernel(%arg0: i32, %arg1: memref<8x16xf32, #tpu.memory_space<vmem>>, %arg2: memref<16x128xf32, #tpu.memory_space<vmem>>, %arg3: memref<1x128xf32, #tpu.memory_space<vmem>>, %arg4: memref<128x128xf32, #tpu.memory_space<vmem>>, %arg5: memref<1x128xf32, #tpu.memory_space<vmem>>, %arg6: memref<128x256xf32, #tpu.memory_space<vmem>>, %arg7: memref<1x256xf32, #tpu.memory_space<vmem>>, %arg8: memref<8x256xf32, #tpu.memory_space<vmem>>) attributes {dimension_semantics = [#tpu.dimension_semantics<parallel>], iteration_bounds = array<i64: 1>, scalar_prefetch = 0 : i64, scratch_operands = 0 : i64, tpu.core_type = #tpu.core_type<tc>, window_params = [{transform_indices = @transform_0, window_bounds = array<i64: 8, 16>}, {pipeline_mode = #tpu.pipeline_mode<synchronous>, transform_indices = @transform_1, window_bounds = array<i64: 16, 128>}, {pipeline_mode = #tpu.pipeline_mode<synchronous>, transform_indices = @transform_2, window_bounds = array<i64: 1, 128>}, {pipeline_mode = #tpu.pipeline_mode<synchronous>, transform_indices = @transform_3, window_bounds = array<i64: 128, 128>}, {pipeline_mode = #tpu.pipeline_mode<synchronous>, transform_indices = @transform_4, window_bounds = array<i64: 1, 128>}, {pipeline_mode = #tpu.pipeline_mode<synchronous>, transform_indices = @transform_5, window_bounds = array<i64: 128, 256>}, {pipeline_mode = #tpu.pipeline_mode<synchronous>, transform_indices = @transform_6, window_bounds = array<i64: 1, 256>}, {transform_indices = @transform_7, window_bounds = array<i64: 8, 256>}]} {
    %c0 = arith.constant 0 : index
    %c0_0 = arith.constant 0 : index
    %0 = vector.load %arg1[%c0, %c0_0] : memref<8x16xf32, #tpu.memory_space<vmem>>, vector<8x16xf32>
    %c0_1 = arith.constant 0 : index
    %c0_2 = arith.constant 0 : index
    %1 = vector.load %arg2[%c0_1, %c0_2] : memref<16x128xf32, #tpu.memory_space<vmem>>, vector<16x128xf32>
    %cst = arith.constant dense<0.000000e+00> : vector<8x128xf32>
    %2 = tpu.matmul %0, %1, %cst {dimension_numbers = #tpu.dot_dimension_numbers<[1], [0], [0], [1], [0, 0, 1, 1], [], []>} : vector<8x16xf32>, vector<16x128xf32>, vector<8x128xf32> -> vector<8x128xf32>
    %c0_3 = arith.constant 0 : index
    %c0_4 = arith.constant 0 : index
    %3 = vector.load %arg3[%c0_3, %c0_4] : memref<1x128xf32, #tpu.memory_space<vmem>>, vector<1x128xf32>
    %4 = vector.broadcast %3 : vector<1x128xf32> to vector<8x128xf32>
    %5 = arith.addf %2, %4 : vector<8x128xf32>
    %cst_5 = arith.constant 0.000000e+00 : f32
    %6 = vector.broadcast %cst_5 : f32 to vector<8x128xf32>
    %7 = arith.maximumf %5, %6 : vector<8x128xf32>
    %c0_6 = arith.constant 0 : index
    %c0_7 = arith.constant 0 : index
    %8 = vector.load %arg4[%c0_6, %c0_7] : memref<128x128xf32, #tpu.memory_space<vmem>>, vector<128x128xf32>
    %cst_8 = arith.constant dense<0.000000e+00> : vector<8x128xf32>
    %9 = tpu.matmul %7, %8, %cst_8 {dimension_numbers = #tpu.dot_dimension_numbers<[1], [0], [0], [1], [0, 0, 1, 1], [], []>} : vector<8x128xf32>, vector<128x128xf32>, vector<8x128xf32> -> vector<8x128xf32>
    %c0_9 = arith.constant 0 : index
    %c0_10 = arith.constant 0 : index
    %10 = vector.load %arg5[%c0_9, %c0_10] : memref<1x128xf32, #tpu.memory_space<vmem>>, vector<1x128xf32>
    %11 = vector.broadcast %10 : vector<1x128xf32> to vector<8x128xf32>
    %12 = arith.addf %9, %11 : vector<8x128xf32>
    %cst_11 = arith.constant 0.000000e+00 : f32
    %13 = vector.broadcast %cst_11 : f32 to vector<8x128xf32>
    %14 = arith.maximumf %12, %13 : vector<8x128xf32>
    %c0_12 = arith.constant 0 : index
    %c0_13 = arith.constant 0 : index
    %15 = vector.load %arg6[%c0_12, %c0_13] : memref<128x256xf32, #tpu.memory_space<vmem>>, vector<128x256xf32>
    %cst_14 = arith.constant dense<0.000000e+00> : vector<8x256xf32>
    %16 = tpu.matmul %14, %15, %cst_14 {dimension_numbers = #tpu.dot_dimension_numbers<[1], [0], [0], [1], [0, 0, 1, 1], [], []>} : vector<8x128xf32>, vector<128x256xf32>, vector<8x256xf32> -> vector<8x256xf32>
    %c0_15 = arith.constant 0 : index
    %c0_16 = arith.constant 0 : index
    %17 = vector.load %arg7[%c0_15, %c0_16] : memref<1x256xf32, #tpu.memory_space<vmem>>, vector<1x256xf32>
    %18 = vector.broadcast %17 : vector<1x256xf32> to vector<8x256xf32>
    %19 = arith.addf %16, %18 : vector<8x256xf32>
    %20 = tpu.iota {dimensions = array<i32: 1>} : vector<8x256xi32>
    %cst_17 = arith.constant -2.000000e+01 : f32
    %cst_18 = arith.constant 2.000000e+00 : f32
    %21 = vector.broadcast %cst_17 : f32 to vector<8x256xf32>
    %22 = arith.maximumf %21, %19 : vector<8x256xf32>
    %23 = vector.broadcast %cst_18 : f32 to vector<8x256xf32>
    %24 = arith.minimumf %23, %22 : vector<8x256xf32>
    %c128_i32 = arith.constant 128 : i32
    %25 = vector.broadcast %c128_i32 : i32 to vector<8x256xi32>
    %26 = arith.cmpi sge, %20, %25 : vector<8x256xi32>
    %27 = arith.select %26, %24, %19 : vector<8x256xi1>, vector<8x256xf32>
    %c0_19 = arith.constant 0 : index
    %c0_20 = arith.constant 0 : index
    %28 = vector.load %arg8[%c0_19, %c0_20] : memref<8x256xf32, #tpu.memory_space<vmem>>, vector<8x256xf32>
    tpu.vector_store %arg8[%c0_19, %c0_20], %27 {strides = array<i32>} : memref<8x256xf32, #tpu.memory_space<vmem>>, vector<8x256xf32>,
    return
  }
  func.func @transform_0(%arg0: i32) -> (i32, i32) {
    %c0_i32 = arith.constant 0 : i32
    %c0_i32_0 = arith.constant 0 : i32
    return %arg0, %c0_i32 : i32, i32
  }
  func.func @transform_1(%arg0: i32) -> (i32, i32) {
    %c0_i32 = arith.constant 0 : i32
    %c0_i32_0 = arith.constant 0 : i32
    %c0_i32_1 = arith.constant 0 : i32
    return %c0_i32, %c0_i32_0 : i32, i32
  }
  func.func @transform_2(%arg0: i32) -> (i32, i32) {
    %c0_i32 = arith.constant 0 : i32
    %c0_i32_0 = arith.constant 0 : i32
    %c0_i32_1 = arith.constant 0 : i32
    return %c0_i32, %c0_i32_0 : i32, i32
  }
  func.func @transform_3(%arg0: i32) -> (i32, i32) {
    %c0_i32 = arith.constant 0 : i32
    %c0_i32_0 = arith.constant 0 : i32
    %c0_i32_1 = arith.constant 0 : i32
    return %c0_i32, %c0_i32_0 : i32, i32
  }
  func.func @transform_4(%arg0: i32) -> (i32, i32) {
    %c0_i32 = arith.constant 0 : i32
    %c0_i32_0 = arith.constant 0 : i32
    %c0_i32_1 = arith.constant 0 : i32
    return %c0_i32, %c0_i32_0 : i32, i32
  }
  func.func @transform_5(%arg0: i32) -> (i32, i32) {
    %c0_i32 = arith.constant 0 : i32
    %c0_i32_0 = arith.constant 0 : i32
    %c0_i32_1 = arith.constant 0 : i32
    return %c0_i32, %c0_i32_0 : i32, i32
  }
  func.func @transform_6(%arg0: i32) -> (i32, i32) {
    %c0_i32 = arith.constant 0 : i32
    %c0_i32_0 = arith.constant 0 : i32
    %c0_i32_1 = arith.constant 0 : i32
    return %c0_i32, %c0_i32_0 : i32, i32
  }
  func.func @transform_7(%arg0: i32) -> (i32, i32) {
    %c0_i32 = arith.constant 0 : i32
    %c0_i32_0 = arith.constant 0 : i32
    return %arg0, %c0_i32 : i32, i32
  }
}

</mosaic_0001>

<llo_original>
// kernel: tpu_custom_call.1
$region0: #{tpu_custom_call.1}
  #allocation0 [shape = 'u32[]', space=smem, size = 0x4, offset = 0x4, fixed_abs, tag = 'smem constant byte address 0x4 - core index']
  #allocation1 [shape = 'u32[144,128]{1,0:T(1,128)}', space=vmem, size = 0x12000, scoped, tag = 'internal scratch']
  %s0 = inlined_call_operand.hbm [shape: f32[8,16], index: 0, kind: input, shape index: {}]
  %s1 = inlined_call_operand.hbm [shape: f32[16,128], index: 1, kind: input, shape index: {}]
  %s2 = inlined_call_operand.vmem [shape: f32[1,128], index: 2, kind: input, shape index: {}]
  %s3 = inlined_call_operand.hbm [shape: f32[128,128], index: 3, kind: input, shape index: {}]
  %s4 = inlined_call_operand.vmem [shape: f32[1,128], index: 4, kind: input, shape index: {}]
  %s5 = inlined_call_operand.hbm [shape: f32[128,256], index: 5, kind: input, shape index: {}]
  %s6 = inlined_call_operand.vmem [shape: f32[1,256], index: 6, kind: input, shape index: {}]
  %s7 = inlined_call_operand.hbm [shape: f32[8,256], index: 7, kind: output, shape index: {}]
  %s8 = sld [smem:[#allocation0]]
  $region54: #{tpu_custom_call.1} parent=0
    _
  %s10 = ssub.s32 1, %s8
  %s11 = scalar_select 0, %s10, %s8
  $region1: #{tpu_custom_call.1} parent=0
    #allocation2 [shape = 'u8[4096]{0}', space=vmem, size = 0x1000, scoped, tag = 'input window, operand 0, single buffered']
    #allocation3 [shape = 's32[1]{0}', space=sflag, size = 0x4, scoped, tag = 'scoped memory for tpu_custom_call.1']
    #allocation4 [shape = 's32[1]{0}', space=sflag, size = 0x4, scoped, tag = 'scoped memory for tpu_custom_call.1']
    #allocation5 [shape = 'u8[8192]{0}', space=vmem, size = 0x2000, scoped, tag = 'input window, operand 1, single buffered']
    #allocation6 [shape = 's32[1]{0}', space=sflag, size = 0x4, scoped, tag = 'scoped memory for tpu_custom_call.1']
    #allocation7 [shape = 'u8[65536]{0}', space=vmem, size = 0x10000, scoped, tag = 'input window, operand 3, single buffered']
    #allocation8 [shape = 'u8[131072]{0}', space=vmem, size = 0x20000, scoped, tag = 'input window, operand 5, single buffered']
    #allocation9 [shape = 's32[1]{0}', space=sflag, size = 0x4, scoped, tag = 'scoped memory for tpu_custom_call.1']
    #allocation10 [shape = 'u8[8192]{0}', space=vmem, size = 0x2000, scoped, tag = 'output window, operand 0, single buffered']
    %12 = vsyncpa [#allocation3], 0
    %13 = vsyncpa [#allocation6], 0
    %14 = vsyncpa [#allocation9], 0
    %15 = vsyncpa [#allocation4], 0
    // Predicated region
    $region2: #{tpu_custom_call.1} parent=1 // pred_check
      _
    $region3: #{tpu_custom_call.1} parent=1 // pred_check_branch
      %17 = sbr.rel (0) target = $region5
    $region4: #{tpu_custom_call.1} parent=1 // pred_region
      %s19 = ssub.s32 128, 128
      %20 = vsyncadd [#allocation3], %s19
      %s22 = sshll.u32 [#allocation2], 4
      %s23 = int_to_ptr.vmem [resolvable:$true] %s22
      %25 = dma.hbm_to_vmem [thread:$0]  %s0, 128, %s23, [#allocation3]
    $region5: #{tpu_custom_call.1} parent=1 // pred_fallthru
      _
    // Predicated region
    $region6: #{tpu_custom_call.1} parent=1 // pred_check
      _
    $region7: #{tpu_custom_call.1} parent=1 // pred_check_branch
      %27 = sbr.rel (0) target = $region9
    $region8: #{tpu_custom_call.1} parent=1 // pred_region
      %s29 = ssub.s32 256, 256
      %30 = vsyncadd [#allocation6], %s29
      %s31 = sshll.u32 [#allocation5], 4
      %s32 = int_to_ptr.vmem [resolvable:$true] %s31
      %37 = dma.hbm_to_vmem [thread:$0]  %s1, 256, %s32, [#allocation6], 128, 128, 8
    $region9: #{tpu_custom_call.1} parent=1 // pred_fallthru
      _
    // Predicated region
    $region10: #{tpu_custom_call.1} parent=1 // pred_check
      _
    $region11: #{tpu_custom_call.1} parent=1 // pred_check_branch
      %39 = sbr.rel (0) target = $region13
    $region12: #{tpu_custom_call.1} parent=1 // pred_region
      _
    $region13: #{tpu_custom_call.1} parent=1 // pred_fallthru
      _
    // Predicated region
    $region14: #{tpu_custom_call.1} parent=1 // pred_check
      _
    $region15: #{tpu_custom_call.1} parent=1 // pred_check_branch
      %41 = sbr.rel (0) target = $region17
    $region16: #{tpu_custom_call.1} parent=1 // pred_region
      %s43 = ssub.s32 2048, 2048
      %44 = vsyncadd [#allocation6], %s43
      %s45 = sshll.u32 [#allocation7], 4
      %s46 = int_to_ptr.vmem [resolvable:$true] %s45
      %51 = dma.hbm_to_vmem [thread:$0]  %s3, 2048, %s46, [#allocation6], 128, 128, 8
    $region17: #{tpu_custom_call.1} parent=1 // pred_fallthru
      _
    // Predicated region
    $region18: #{tpu_custom_call.1} parent=1 // pred_check
      _
    $region19: #{tpu_custom_call.1} parent=1 // pred_check_branch
      %53 = sbr.rel (0) target = $region21
    $region20: #{tpu_custom_call.1} parent=1 // pred_region
      _
    $region21: #{tpu_custom_call.1} parent=1 // pred_fallthru
      _
    // Predicated region
    $region22: #{tpu_custom_call.1} parent=1 // pred_check
      _
    $region23: #{tpu_custom_call.1} parent=1 // pred_check_branch
      %55 = sbr.rel (0) target = $region25
    $region24: #{tpu_custom_call.1} parent=1 // pred_region
      %s57 = ssub.s32 4096, 4096
      %58 = vsyncadd [#allocation9], %s57
      %s59 = sshll.u32 [#allocation8], 4
      %s60 = int_to_ptr.vmem [resolvable:$true] %s59
      %65 = dma.hbm_to_vmem [thread:$0]  %s5, 4096, %s60, [#allocation9], 256, 256, 16
    $region25: #{tpu_custom_call.1} parent=1 // pred_fallthru
      _
    // Predicated region
    $region26: #{tpu_custom_call.1} parent=1 // pred_check
      _
    $region27: #{tpu_custom_call.1} parent=1 // pred_check_branch
      %67 = sbr.rel (0) target = $region29
    $region28: #{tpu_custom_call.1} parent=1 // pred_region
      _
    $region29: #{tpu_custom_call.1} parent=1 // pred_fallthru
      _
    // Predicated region
    $region30: #{tpu_custom_call.1} parent=1 // pred_check
      _
    $region31: #{tpu_custom_call.1} parent=1 // pred_check_branch
      %69 = sbr.rel (0) target = $region33
    $region32: #{tpu_custom_call.1} parent=1 // pred_region
      %70 = dma.done [#allocation3], 128
    $region33: #{tpu_custom_call.1} parent=1 // pred_fallthru
      _
    // Predicated region
    $region34: #{tpu_custom_call.1} parent=1 // pred_check
      _
    $region35: #{tpu_custom_call.1} parent=1 // pred_check_branch
      %72 = sbr.rel (0) target = $region37
    $region36: #{tpu_custom_call.1} parent=1 // pred_region
      %73 = dma.done [#allocation6], 256
    $region37: #{tpu_custom_call.1} parent=1 // pred_fallthru
      _
    // Predicated region
    $region38: #{tpu_custom_call.1} parent=1 // pred_check
      _
    $region39: #{tpu_custom_call.1} parent=1 // pred_check_branch
      %75 = sbr.rel (0) target = $region41
    $region40: #{tpu_custom_call.1} parent=1 // pred_region
      %76 = dma.done [#allocation6], 2048
    $region41: #{tpu_custom_call.1} parent=1 // pred_fallthru
      _
    // Predicated region
    $region42: #{tpu_custom_call.1} parent=1 // pred_check
      _
    $region43: #{tpu_custom_call.1} parent=1 // pred_check_branch
      %78 = sbr.rel (0) target = $region45
    $region44: #{tpu_custom_call.1} parent=1 // pred_region
      %79 = dma.done [#allocation9], 4096
    $region45: #{tpu_custom_call.1} parent=1 // pred_fallthru
      _
    %v80 = vld [vmem:[#allocation2] sm:$0xff]
    %v81 = vld [vmem:[#allocation5] sm:$0xff]
    %v82 = vld [vmem:[#allocation5 + $0x8] sm:$0xff]
    %v83 = vld [vmem:[%s2] sm:$0x1]
    %v85 = vlaneseq
    %v86 = vshrl.u32 %v85, 7
    %v87 = vsub.s32 0, %v86
    %v88 = vrot.slane %v83, %v87
    %vm90 = vcmask 130048
    %v92 = vsel %vm90, %v80, 0
    %94 = vmatprep.subr.mxu0 0.0
    %95 = vmatpush1.msra.mxu0 0.0
    %96 = vmatprep.subr.mxu0 0.0
    %97 = vmatpush1.msra.mxu0 0.0
    %98 = vmatprep.subr.mxu0 0.0
    %99 = vmatpush1.msra.mxu0 0.0
    %100 = vmatprep.subr.mxu0 0.0
    %101 = vmatpush1.msra.mxu0 0.0
    %102 = vmatprep.subr.mxu0 0.0
    %103 = vmatpush1.msra.mxu0 0.0
    %104 = vmatprep.subr.mxu0 0.0
    %105 = vmatpush1.msra.mxu0 0.0
    %106 = vmatprep.subr.mxu0 0.0
    %107 = vmatpush1.msra.mxu0 0.0
    %108 = vmatprep.subr.mxu0 0.0
    %109 = vmatpush1.msra.mxu0 0.0
    %110 = vmatprep.subr.mxu0 0.0
    %111 = vmatpush1.msra.mxu0 0.0
    %112 = vmatprep.subr.mxu0 0.0
    %113 = vmatpush1.msra.mxu0 0.0
    %114 = vmatprep.subr.mxu0 0.0
    %115 = vmatpush1.msra.mxu0 0.0
    %116 = vmatprep.subr.mxu0 0.0
    %117 = vmatpush1.msra.mxu0 0.0
    %118 = vmatprep.subr.mxu0 0.0
    %119 = vmatpush1.msra.mxu0 0.0
    %120 = vmatprep.subr.mxu0 0.0
    %121 = vmatpush1.msra.mxu0 0.0
    %122 = vmatprep.subr.mxu0 0.0
    %123 = vmatpush1.msra.mxu0 %v82
    %124 = vmatprep.subr.mxu0 0.0
    %125 = vmatpush1.msra.mxu0 %v81
    %126 = vmatprep.subr.mxu0 0.0
    %127 = vmatpush2.msra.mxu0 0.0
    %128 = vmatprep.subr.mxu0 0.0
    %129 = vmatpush2.msra.mxu0 0.0
    %130 = vmatprep.subr.mxu0 0.0
    %131 = vmatpush2.msra.mxu0 0.0
    %132 = vmatprep.subr.mxu0 0.0
    %133 = vmatpush2.msra.mxu0 0.0
    %134 = vmatprep.subr.mxu0 0.0
    %135 = vmatpush2.msra.mxu0 0.0
    %136 = vmatprep.subr.mxu0 0.0
    %137 = vmatpush2.msra.mxu0 0.0
    %138 = vmatprep.subr.mxu0 0.0
    %139 = vmatpush2.msra.mxu0 0.0
    %140 = vmatprep.subr.mxu0 0.0
    %141 = vmatpush2.msra.mxu0 0.0
    %142 = vmatprep.subr.mxu0 0.0
    %143 = vmatpush2.msra.mxu0 0.0
    %144 = vmatprep.subr.mxu0 0.0
    %145 = vmatpush2.msra.mxu0 0.0
    %146 = vmatprep.subr.mxu0 0.0
    %147 = vmatpush2.msra.mxu0 0.0
    %148 = vmatprep.subr.mxu0 0.0
    %149 = vmatpush2.msra.mxu0 0.0
    %150 = vmatprep.subr.mxu0 0.0
    %151 = vmatpush2.msra.mxu0 0.0
    %152 = vmatprep.subr.mxu0 0.0
    %153 = vmatpush2.msra.mxu0 0.0
    %154 = vmatprep.subr.mxu0 0.0
    %155 = vmatpush2.msra.mxu0 0.0
    %156 = vmatprep.subr.mxu0 0.0
    %157 = vmatpush2.msra.mxu0 0.0
    %158 = vmatprep.mubr.f32.mxu0 0.0
    %159 = vmatmul.mubr.f32.gmra.mxu0 %v92
    %v160 = vpop.f32.mrf.mxu0
    %v161 = vadd.f32 %v88, %v160
    %v162 = vpop.f32.mrf.mxu0
    %163 = vdwg.mxu0
    %v164 = vmax.f32 %v161, 0.0
    %v165 = vld [vmem:[#allocation7] sm:$0xff]
    %v166 = vld [vmem:[#allocation7 + $0x8] sm:$0xff]
    %v167 = vld [vmem:[#allocation7 + $0x10] sm:$0xff]
    %v168 = vld [vmem:[#allocation7 + $0x18] sm:$0xff]
    %v169 = vld [vmem:[#allocation7 + $0x20] sm:$0xff]
    %v170 = vld [vmem:[#allocation7 + $0x28] sm:$0xff]
    %v171 = vld [vmem:[#allocation7 + $0x30] sm:$0xff]
    %v172 = vld [vmem:[#allocation7 + $0x38] sm:$0xff]
    %v173 = vld [vmem:[#allocation7 + $0x40] sm:$0xff]
    %v174 = vld [vmem:[#allocation7 + $0x48] sm:$0xff]
    %v175 = vld [vmem:[#allocation7 + $0x50] sm:$0xff]
    %v176 = vld [vmem:[#allocation7 + $0x58] sm:$0xff]
    %v177 = vld [vmem:[#allocation7 + $0x60] sm:$0xff]
    %v178 = vld [vmem:[#allocation7 + $0x68] sm:$0xff]
    %v179 = vld [vmem:[#allocation7 + $0x70] sm:$0xff]
    %v180 = vld [vmem:[#allocation7 + $0x78] sm:$0xff]
    %v181 = vld [vmem:[%s4] sm:$0x1]
    %v183 = vlaneseq
    %v184 = vshrl.u32 %v183, 7
    %v185 = vsub.s32 0, %v184
    %v186 = vrot.slane %v181, %v185
    %188 = vmatprep.subr.mxu0 0.0
    %189 = vmatpush1.msra.mxu0 %v180
    %190 = vmatprep.subr.mxu0 0.0
    %191 = vmatpush1.msra.mxu0 %v179
    %192 = vmatprep.subr.mxu0 0.0
    %193 = vmatpush1.msra.mxu0 %v178
    %194 = vmatprep.subr.mxu0 0.0
    %195 = vmatpush1.msra.mxu0 %v177
    %196 = vmatprep.subr.mxu0 0.0
    %197 = vmatpush1.msra.mxu0 %v176
    %198 = vmatprep.subr.mxu0 0.0
    %199 = vmatpush1.msra.mxu0 %v175
    %200 = vmatprep.subr.mxu0 0.0
    %201 = vmatpush1.msra.mxu0 %v174
    %202 = vmatprep.subr.mxu0 0.0
    %203 = vmatpush1.msra.mxu0 %v173
    %204 = vmatprep.subr.mxu0 0.0
    %205 = vmatpush1.msra.mxu0 %v172
    %206 = vmatprep.subr.mxu0 0.0
    %207 = vmatpush1.msra.mxu0 %v171
    %208 = vmatprep.subr.mxu0 0.0
    %209 = vmatpush1.msra.mxu0 %v170
    %210 = vmatprep.subr.mxu0 0.0
    %211 = vmatpush1.msra.mxu0 %v169
    %212 = vmatprep.subr.mxu0 0.0
    %213 = vmatpush1.msra.mxu0 %v168
    %214 = vmatprep.subr.mxu0 0.0
    %215 = vmatpush1.msra.mxu0 %v167
    %216 = vmatprep.subr.mxu0 0.0
    %217 = vmatpush1.msra.mxu0 %v166
    %218 = vmatprep.subr.mxu0 0.0
    %219 = vmatpush1.msra.mxu0 %v165
    %220 = vmatprep.subr.mxu0 0.0
    %221 = vmatpush2.msra.mxu0 0.0
    %222 = vmatprep.subr.mxu0 0.0
    %223 = vmatpush2.msra.mxu0 0.0
    %224 = vmatprep.subr.mxu0 0.0
    %225 = vmatpush2.msra.mxu0 0.0
    %226 = vmatprep.subr.mxu0 0.0
    %227 = vmatpush2.msra.mxu0 0.0
    %228 = vmatprep.subr.mxu0 0.0
    %229 = vmatpush2.msra.mxu0 0.0
    %230 = vmatprep.subr.mxu0 0.0
    %231 = vmatpush2.msra.mxu0 0.0
    %232 = vmatprep.subr.mxu0 0.0
    %233 = vmatpush2.msra.mxu0 0.0
    %234 = vmatprep.subr.mxu0 0.0
    %235 = vmatpush2.msra.mxu0 0.0
    %236 = vmatprep.subr.mxu0 0.0
    %237 = vmatpush2.msra.mxu0 0.0
    %238 = vmatprep.subr.mxu0 0.0
    %239 = vmatpush2.msra.mxu0 0.0
    %240 = vmatprep.subr.mxu0 0.0
    %241 = vmatpush2.msra.mxu0 0.0
    %242 = vmatprep.subr.mxu0 0.0
    %243 = vmatpush2.msra.mxu0 0.0
    %244 = vmatprep.subr.mxu0 0.0
    %245 = vmatpush2.msra.mxu0 0.0
    %246 = vmatprep.subr.mxu0 0.0
    %247 = vmatpush2.msra.mxu0 0.0
    %248 = vmatprep.subr.mxu0 0.0
    %249 = vmatpush2.msra.mxu0 0.0
    %250 = vmatprep.subr.mxu0 0.0
    %251 = vmatpush2.msra.mxu0 0.0
    %252 = vmatprep.mubr.f32.mxu0 0.0
    %253 = vmatmul.mubr.f32.gmra.mxu0 %v164
    %v254 = vpop.f32.mrf.mxu0
    %v255 = vadd.f32 %v186, %v254
    %v256 = vpop.f32.mrf.mxu0
    %257 = vdwg.mxu0
    %v258 = vmax.f32 %v255, 0.0
    %v259 = vld [vmem:[#allocation8] sm:$0xff]
    %v260 = vld [vmem:[#allocation8 + $0x8] sm:$0xff]
    %v261 = vld [vmem:[#allocation8 + $0x10] sm:$0xff]
    %v262 = vld [vmem:[#allocation8 + $0x18] sm:$0xff]
    %v263 = vld [vmem:[#allocation8 + $0x20] sm:$0xff]
    %v264 = vld [vmem:[#allocation8 + $0x28] sm:$0xff]
    %v265 = vld [vmem:[#allocation8 + $0x30] sm:$0xff]
    %v266 = vld [vmem:[#allocation8 + $0x38] sm:$0xff]
    %v267 = vld [vmem:[#allocation8 + $0x40] sm:$0xff]
    %v268 = vld [vmem:[#allocation8 + $0x48] sm:$0xff]
    %v269 = vld [vmem:[#allocation8 + $0x50] sm:$0xff]
    %v270 = vld [vmem:[#allocation8 + $0x58] sm:$0xff]
    %v271 = vld [vmem:[#allocation8 + $0x60] sm:$0xff]
    %v272 = vld [vmem:[#allocation8 + $0x68] sm:$0xff]
    %v273 = vld [vmem:[#allocation8 + $0x70] sm:$0xff]
    %v274 = vld [vmem:[#allocation8 + $0x78] sm:$0xff]
    %v275 = vld [vmem:[#allocation8 + $0x80] sm:$0xff]
    %v276 = vld [vmem:[#allocation8 + $0x88] sm:$0xff]
    %v277 = vld [vmem:[#allocation8 + $0x90] sm:$0xff]
    %v278 = vld [vmem:[#allocation8 + $0x98] sm:$0xff]
    %v279 = vld [vmem:[#allocation8 + $0xa0] sm:$0xff]
    %v280 = vld [vmem:[#allocation8 + $0xa8] sm:$0xff]
    %v281 = vld [vmem:[#allocation8 + $0xb0] sm:$0xff]
    %v282 = vld [vmem:[#allocation8 + $0xb8] sm:$0xff]
    %v283 = vld [vmem:[#allocation8 + $0xc0] sm:$0xff]
    %v284 = vld [vmem:[#allocation8 + $0xc8] sm:$0xff]
    %v285 = vld [vmem:[#allocation8 + $0xd0] sm:$0xff]
    %v286 = vld [vmem:[#allocation8 + $0xd8] sm:$0xff]
    %v287 = vld [vmem:[#allocation8 + $0xe0] sm:$0xff]
    %v288 = vld [vmem:[#allocation8 + $0xe8] sm:$0xff]
    %v289 = vld [vmem:[#allocation8 + $0xf0] sm:$0xff]
    %v290 = vld [vmem:[#allocation8 + $0xf8] sm:$0xff]
    %v291 = vld [vmem:[%s6] sm:$0x3]
    %v293 = vlaneseq
    %v294 = vshrl.u32 %v293, 7
    %v295 = vsub.s32 0, %v294
    %v296 = vrot.slane %v291, %v295
    %v297 = vlaneseq
    %v298 = vshrl.u32 %v297, 7
    %v299 = vsub.s32 1, %v298
    %v300 = vrot.slane %v291, %v299
    %303 = vmatprep.subr.mxu0 %v290
    %304 = vmatpush1.msra.mxu0 %v289
    %305 = vmatprep.subr.mxu0 %v288
    %306 = vmatpush1.msra.mxu0 %v287
    %307 = vmatprep.subr.mxu0 %v286
    %308 = vmatpush1.msra.mxu0 %v285
    %309 = vmatprep.subr.mxu0 %v284
    %310 = vmatpush1.msra.mxu0 %v283
    %311 = vmatprep.subr.mxu0 %v282
    %312 = vmatpush1.msra.mxu0 %v281
    %313 = vmatprep.subr.mxu0 %v280
    %314 = vmatpush1.msra.mxu0 %v279
    %315 = vmatprep.subr.mxu0 %v278
    %316 = vmatpush1.msra.mxu0 %v277
    %317 = vmatprep.subr.mxu0 %v276
    %318 = vmatpush1.msra.mxu0 %v275
    %319 = vmatprep.subr.mxu0 %v274
    %320 = vmatpush1.msra.mxu0 %v273
    %321 = vmatprep.subr.mxu0 %v272
    %322 = vmatpush1.msra.mxu0 %v271
    %323 = vmatprep.subr.mxu0 %v270
    %324 = vmatpush1.msra.mxu0 %v269
    %325 = vmatprep.subr.mxu0 %v268
    %326 = vmatpush1.msra.mxu0 %v267
    %327 = vmatprep.subr.mxu0 %v266
    %328 = vmatpush1.msra.mxu0 %v265
    %329 = vmatprep.subr.mxu0 %v264
    %330 = vmatpush1.msra.mxu0 %v263
    %331 = vmatprep.subr.mxu0 %v262
    %332 = vmatpush1.msra.mxu0 %v261
    %333 = vmatprep.subr.mxu0 %v260
    %334 = vmatpush1.msra.mxu0 %v259
    %335 = vmatprep.subr.mxu0 0.0
    %336 = vmatpush2.msra.mxu0 0.0
    %337 = vmatprep.subr.mxu0 0.0
    %338 = vmatpush2.msra.mxu0 0.0
    %339 = vmatprep.subr.mxu0 0.0
    %340 = vmatpush2.msra.mxu0 0.0
    %341 = vmatprep.subr.mxu0 0.0
    %342 = vmatpush2.msra.mxu0 0.0
    %343 = vmatprep.subr.mxu0 0.0
    %344 = vmatpush2.msra.mxu0 0.0
    %345 = vmatprep.subr.mxu0 0.0
    %346 = vmatpush2.msra.mxu0 0.0
    %347 = vmatprep.subr.mxu0 0.0
    %348 = vmatpush2.msra.mxu0 0.0
    %349 = vmatprep.subr.mxu0 0.0
    %350 = vmatpush2.msra.mxu0 0.0
    %351 = vmatprep.subr.mxu0 0.0
    %352 = vmatpush2.msra.mxu0 0.0
    %353 = vmatprep.subr.mxu0 0.0
    %354 = vmatpush2.msra.mxu0 0.0
    %355 = vmatprep.subr.mxu0 0.0
    %356 = vmatpush2.msra.mxu0 0.0
    %357 = vmatprep.subr.mxu0 0.0
    %358 = vmatpush2.msra.mxu0 0.0
    %359 = vmatprep.subr.mxu0 0.0
    %360 = vmatpush2.msra.mxu0 0.0
    %361 = vmatprep.subr.mxu0 0.0
    %362 = vmatpush2.msra.mxu0 0.0
    %363 = vmatprep.subr.mxu0 0.0
    %364 = vmatpush2.msra.mxu0 0.0
    %365 = vmatprep.subr.mxu0 0.0
    %366 = vmatpush2.msra.mxu0 0.0
    %367 = vmatprep.mubr.f32.mxu0 0.0
    %368 = vmatmul.mubr.f32.gmra.mxu0 %v258
    %v369 = vpop.f32.mrf.mxu0
    %v370 = vadd.f32 %v296, %v369
    %v371 = vpop.f32.mrf.mxu0
    %v372 = vadd.f32 %v300, %v371
    %373 = vdwg.mxu0
    %v374 = vlaneseq
    %v375 = vand.u32 %v374, 127
    %v376 = vadd.s32 %v375, 128
    %v377 = vmax.f32 %v370, -20.0
    %v378 = vmax.f32 %v372, -20.0
    %v379 = vmin.f32 %v377, 2.0
    %v380 = vmin.f32 %v378, 2.0
    %vm381 = vcmp.ge.s32.totalorder %v375, 128
    %vm382 = vcmp.ge.s32.totalorder %v376, 128
    %v383 = vsel %vm381, %v379, %v370
    %v384 = vsel %vm382, %v380, %v372
    %385 = vst [vmem:[#allocation10] sm:$0xff] %v383
    %386 = vst [vmem:[#allocation10 + $0x8] sm:$0xff] %v384
    // Predicated region
    $region46: #{tpu_custom_call.1} parent=1 // pred_check
      _
    $region47: #{tpu_custom_call.1} parent=1 // pred_check_branch
      %388 = sbr.rel (0) target = $region49
    $region48: #{tpu_custom_call.1} parent=1 // pred_region
      %s390 = ssub.s32 256, 256
      %391 = vsyncadd [#allocation4], %s390
      %s393 = sshll.u32 [#allocation10], 4
      %s394 = int_to_ptr.vmem [resolvable:$true] %s393
      %396 = dma.vmem_to_hbm [thread:$0]  %s394, 256, %s7, [#allocation4]
    $region49: #{tpu_custom_call.1} parent=1 // pred_fallthru
      _
    // Predicated region
    $region50: #{tpu_custom_call.1} parent=1 // pred_check
      _
    $region51: #{tpu_custom_call.1} parent=1 // pred_check_branch
      %398 = sbr.rel (0) target = $region53
    $region52: #{tpu_custom_call.1} parent=1 // pred_region
      %399 = dma.done [#allocation4], 256
    $region53: #{tpu_custom_call.1} parent=1 // pred_fallthru
      _
    %400 = vsyncpa [#allocation3], 1
    %401 = vsyncpa [#allocation6], 1
    %402 = vsyncpa [#allocation9], 1
    %403 = vsyncpa [#allocation4], 1

</llo_original>
